<compile_context>
chip_gen: v6e
topology: v6e:2x2x1
jax: 0.10.0
libtpu: 0.0.40
codegen_flags: <defaults>
</compile_context>

<pallas_src>
import jax
import jax.numpy as jnp
from jax.experimental import pallas as pl
from jax.experimental.pallas import tpu as pltpu

# ----------------------- model hyper-parameters (small) ---------------------
MODEL_DIM = 32          # d_model
HIDDEN_SIZE = 64        # d_hidden
NUM_EXPERTS = 4         # num_local_experts (world_size = 1)
TOP_K = 2
BATCH = 2
SEQ = 8


# ------------------------------ fused kernel --------------------------------
def fused_moe_kernel(x_ref, w_ref, c_ref, o_ref):
    T, dm = x_ref.shape
    E, ccols = c_ref.shape
    Edh = ccols - E                                    # E * d_hidden
    B, S = o_ref.shape

    x = x_ref[...]                                     # (T, dm)

    # --- one fused MXU matmul: [h_pre | gate_logits] = x @ [W1_all | Wg] + [b1 | bg]
    fused = (jnp.dot(x, w_ref[:dm, :], preferred_element_type=jnp.float32)
             + w_ref[dm:dm + 1, :])                    # (T, Edh + E)
    h_pre = fused[:, :Edh]                             # (T, Edh)
    logits = fused[:, Edh:]                            # (T, E)

    # --- NaiveGate: top-2 -> softmax over the two top logits -> dense combine (T, E)
    col = jax.lax.broadcasted_iota(jnp.int32, (T, E), 1)
    m1 = jnp.max(logits, axis=-1, keepdims=True)                      # top-1 value
    idx1 = jnp.min(jnp.where(logits == m1, col, E), axis=-1, keepdims=True)
    mask1 = col == idx1
    masked = jnp.where(mask1, -jnp.inf, logits)
    m2 = jnp.max(masked, axis=-1, keepdims=True)                      # top-2 value
    idx2 = jnp.min(jnp.where(masked == m2, col, E), axis=-1, keepdims=True)
    mask2 = col == idx2
    e2 = jnp.exp(m2 - m1)                    # softmax over the 2 top values
    inv = 1.0 / (1.0 + e2)
    combine = jnp.where(mask1, inv, 0.0) + jnp.where(mask2, e2 * inv, 0.0)

    # --- exact GELU (erf form, matches torch.nn.GELU default).  erf is built
    # from the Abramowitz-Stegun 7.1.26 polynomial (|err| < 1.5e-7) so we only
    # rely on exp/abs/mul/where lowerings (no lax.erf in Mosaic).
    z = h_pre * 0.70710678118654752
    az = jnp.abs(z)
    t = 1.0 / (1.0 + 0.3275911 * az)
    poly = ((((1.061405429 * t - 1.453152027) * t + 1.421413741) * t
             - 0.284496736) * t + 0.254829592) * t
    erf_abs = 1.0 - poly * jnp.exp(-az * az)
    erf_z = jnp.where(z >= 0.0, erf_abs, -erf_abs)
    h = 0.5 * h_pre * (1.0 + erf_z)                    # (T, Edh)

    # --- second expert layer pre-reduced over d_model:
    #   c_ref = [ expand2 | diag(b2sum) ] with
    #   expand2[e, j] = [j // dh == e] * sum_m W2[e, j % dh, m]
    cw = jnp.dot(combine, c_ref[...], preferred_element_type=jnp.float32)  # (T, Edh+E)
    s = (jnp.sum((h * cw[:, :Edh]).reshape(B, S, Edh), axis=-1)
         + jnp.sum(cw[:, Edh:].reshape(B, S, E), axis=-1))                 # (B, S)

    # --- log_softmax over seq (dim=1)
    m = jnp.max(s, axis=1, keepdims=True)
    lse = jnp.log(jnp.sum(jnp.exp(s - m), axis=1, keepdims=True)) + m
    o_ref[...] = s - lse


# -------------------- one-time parameter re-layout (hoisted) -----------------
def prepare_operands(params):
    """Build the fused kernel operands ONCE (not in the per-call forward path)."""
    dm, dh, E = MODEL_DIM, HIDDEN_SIZE, NUM_EXPERTS

    # first layer + gate fused: columns [W1_all | Wg], extra row = [b1_all | bg]
    w1_all = jnp.transpose(params["w1"], (1, 0, 2)).reshape(dm, E * dh)   # (dm, E*dh)
    b1_all = params["b1"].reshape(1, E * dh)
    wg = params["wg"]                                                     # (dm, E)
    bg = params["bg"].reshape(1, E)
    w_all = jnp.concatenate(
        [jnp.concatenate([w1_all, wg], axis=1),
         jnp.concatenate([b1_all, bg], axis=1)], axis=0)                  # (dm+1, E*dh+E)

    # second layer pre-reduced over d_model (only sum over d_model is needed)
    w2sum = jnp.sum(params["w2"], axis=-1).reshape(E * dh)                # (E*dh,)
    b2sum = jnp.sum(params["b2"].reshape(E, dm), axis=-1)                 # (E,)
    erow = jnp.arange(E)[:, None]
    ecol = jnp.arange(E * dh)[None, :]
    expand2 = jnp.where(ecol // dh == erow, w2sum[None, :], 0.0)          # (E, E*dh)
    c_all = jnp.concatenate([expand2, jnp.diag(b2sum)], axis=1)           # (E, E*dh+E)

    return w_all.astype(jnp.float32), c_all.astype(jnp.float32)


# -------------------------------- forward -----------------------------------
def example_model_forward(x, w_all, c_all):
    B, S, dm = x.shape
    T = B * S
    x_flat = x.reshape(T, dm)
    return pl.pallas_call(
        fused_moe_kernel,
        out_shape=jax.ShapeDtypeStruct((B, S), jnp.float32),
        grid=(1,),
        in_specs=[
            pl.BlockSpec((T, dm), lambda i: (0, 0)),             # x
            pl.BlockSpec(w_all.shape, lambda i: (0, 0)),         # [W1_all|Wg] + bias row
            pl.BlockSpec(c_all.shape, lambda i: (0, 0)),         # [expand2|diag(b2sum)]
        ],
        out_specs=pl.BlockSpec((B, S), lambda i: (0, 0)),
        compiler_params=pltpu.CompilerParams(
            dimension_semantics=("arbitrary",)),
    )(x_flat, w_all, c_all)


# ------------------------ pure-JAX reference (check) -------------------------
def reference_forward(x, params):
    B, S, dm = x.shape
    T = B * S
    xf = x.reshape(T, dm)
    logits = xf @ params["wg"] + params["bg"]
    topv, topi = jax.lax.top_k(logits, TOP_K)
    score = jax.nn.softmax(topv, axis=-1)
    out = jnp.zeros((T, dm), jnp.float32)
    for k in range(TOP_K):
        w = score[:, k:k + 1]
        idx = topi[:, k]
        h = jnp.einsum('td,tdh->th', xf, params["w1"][idx]) + params["b1"][idx, 0]
        h = jax.nn.gelu(h, approximate=False)
        y = jnp.einsum('th,thd->td', h, params["w2"][idx]) + params["b2"][idx, 0]
        out = out + w * y
    s = jnp.sum(out.reshape(B, S, dm), axis=-1)
    return jax.nn.log_softmax(s, axis=1)


# ------------------------- deterministic parameters --------------------------
def init_params(key):
    ks = jax.random.split(key, 6)
    dm, dh, E = MODEL_DIM, HIDDEN_SIZE, NUM_EXPERTS
    return {
        # gate: nn.Linear(d_model, num_expert)
        "wg": jax.random.normal(ks[0], (dm, E), jnp.float32) / jnp.sqrt(dm),
        "bg": jax.random.normal(ks[1], (E,), jnp.float32) * 0.01,
        # expert MLP: FMoELinear(E, dm, dh) / FMoELinear(E, dh, dm), bias=True
        "w1": jax.random.normal(ks[2], (E, dm, dh), jnp.float32) / jnp.sqrt(dm),
        "b1": jax.random.normal(ks[3], (E, 1, dh), jnp.float32) * 0.01,
        "w2": jax.random.normal(ks[4], (E, dh, dm), jnp.float32) / jnp.sqrt(dh),
        "b2": jax.random.normal(ks[5], (E, 1, dm), jnp.float32) * 0.01,
    }


if __name__ == "__main__":
    key = jax.random.PRNGKey(0)
    k_x, k_p = jax.random.split(key)
    params = init_params(k_p)
    x = jax.random.normal(k_x, (BATCH, SEQ, MODEL_DIM), jnp.float32)

    # one-time re-layout, outside the jitted forward path
    w_all, c_all = jax.block_until_ready(prepare_operands(params))

    fwd = jax.jit(example_model_forward)
    out = jax.block_until_ready(fwd(x, w_all, c_all))

    assert out.shape == (BATCH, SEQ)
    # log_softmax rows must sum (in prob space) to 1.
    assert jnp.allclose(jnp.sum(jnp.exp(out), axis=1), 1.0, atol=1e-4)
    # Match the pure-JAX reference of the PyTorch forward.
    ref = reference_forward(x, params)
    assert jnp.allclose(out, ref, atol=1e-4, rtol=1e-4)
    print("KERNEL_OK")
</pallas_src>

<mosaic_0001>
module attributes {stable_mosaic.version = 11 : i64} {
  func.func @fused_moe_kernel(%arg0: i32, %arg1: memref<16x32xf32, #tpu.memory_space<vmem>>, %arg2: memref<33x260xf32, #tpu.memory_space<vmem>>, %arg3: memref<4x260xf32, #tpu.memory_space<vmem>>, %arg4: memref<2x8xf32, #tpu.memory_space<vmem>>) attributes {dimension_semantics = [#tpu.dimension_semantics<arbitrary>], iteration_bounds = array<i64: 1>, scalar_prefetch = 0 : i64, scratch_operands = 0 : i64, tpu.core_type = #tpu.core_type<tc>, window_params = [{pipeline_mode = #tpu.pipeline_mode<synchronous>, transform_indices = @transform_0, window_bounds = array<i64: 16, 32>}, {pipeline_mode = #tpu.pipeline_mode<synchronous>, transform_indices = @transform_1, window_bounds = array<i64: 33, 260>}, {pipeline_mode = #tpu.pipeline_mode<synchronous>, transform_indices = @transform_2, window_bounds = array<i64: 4, 260>}, {pipeline_mode = #tpu.pipeline_mode<synchronous>, transform_indices = @transform_3, window_bounds = array<i64: 2, 8>}]} {
    %c0 = arith.constant 0 : index
    %c0_0 = arith.constant 0 : index
    %0 = vector.load %arg1[%c0, %c0_0] : memref<16x32xf32, #tpu.memory_space<vmem>>, vector<16x32xf32>
    %c0_1 = arith.constant 0 : index
    %c0_2 = arith.constant 0 : index
    %1 = vector.load %arg2[%c0_1, %c0_2] : memref<33x260xf32, #tpu.memory_space<vmem>>, vector<32x260xf32>
    %cst = arith.constant dense<0.000000e+00> : vector<16x260xf32>
    %2 = tpu.matmul %0, %1, %cst {dimension_numbers = #tpu.dot_dimension_numbers<[1], [0], [0], [1], [0, 0, 1, 1], [], []>} : vector<16x32xf32>, vector<32x260xf32>, vector<16x260xf32> -> vector<16x260xf32>
    %c32 = arith.constant 32 : index
    %c0_3 = arith.constant 0 : index
    %3 = vector.load %arg2[%c32, %c0_3] : memref<33x260xf32, #tpu.memory_space<vmem>>, vector<1x260xf32>
    %4 = vector.broadcast %3 : vector<1x260xf32> to vector<16x260xf32>
    %5 = arith.addf %2, %4 : vector<16x260xf32>
    %6 = vector.extract_strided_slice %5 {offsets = [0, 0], sizes = [16, 256], strides = [1, 1]} : vector<16x260xf32> to vector<16x256xf32>
    %7 = vector.extract_strided_slice %5 {offsets = [0, 256], sizes = [16, 4], strides = [1, 1]} : vector<16x260xf32> to vector<16x4xf32>
    %8 = tpu.iota {dimensions = array<i32: 1>} : vector<16x4xi32>
    %cst_4 = arith.constant dense<0xFF800000> : vector<16xf32>
    %9 = vector.multi_reduction <maximumf>, %7, %cst_4 [1] : vector<16x4xf32> to vector<16xf32>
    %10 = vector.shape_cast %9 : vector<16xf32> to vector<16x1xf32>
    %11 = vector.broadcast %10 : vector<16x1xf32> to vector<16x4xf32>
    %12 = arith.cmpf oeq, %7, %11 : vector<16x4xf32>
    %c4_i32 = arith.constant 4 : i32
    %13 = vector.broadcast %c4_i32 : i32 to vector<16x4xi32>
    %14 = arith.select %12, %8, %13 : vector<16x4xi1>, vector<16x4xi32>
    %cst_5 = arith.constant dense<2147483647> : vector<16xi32>
    %15 = vector.multi_reduction <minsi>, %14, %cst_5 [1] : vector<16x4xi32> to vector<16xi32>
    %16 = vector.shape_cast %15 : vector<16xi32> to vector<16x1xi32>
    %17 = vector.broadcast %16 : vector<16x1xi32> to vector<16x4xi32>
    %18 = arith.cmpi eq, %8, %17 : vector<16x4xi32>
    %cst_6 = arith.constant 0xFF800000 : f32
    %19 = vector.broadcast %cst_6 : f32 to vector<16x4xf32>
    %20 = arith.select %18, %19, %7 : vector<16x4xi1>, vector<16x4xf32>
    %cst_7 = arith.constant dense<0xFF800000> : vector<16xf32>
    %21 = vector.multi_reduction <maximumf>, %20, %cst_7 [1] : vector<16x4xf32> to vector<16xf32>
    %22 = vector.shape_cast %21 : vector<16xf32> to vector<16x1xf32>
    %23 = vector.broadcast %22 : vector<16x1xf32> to vector<16x4xf32>
    %24 = arith.cmpf oeq, %20, %23 : vector<16x4xf32>
    %c4_i32_8 = arith.constant 4 : i32
    %25 = vector.broadcast %c4_i32_8 : i32 to vector<16x4xi32>
    %26 = arith.select %24, %8, %25 : vector<16x4xi1>, vector<16x4xi32>
    %cst_9 = arith.constant dense<2147483647> : vector<16xi32>
    %27 = vector.multi_reduction <minsi>, %26, %cst_9 [1] : vector<16x4xi32> to vector<16xi32>
    %28 = vector.shape_cast %27 : vector<16xi32> to vector<16x1xi32>
    %29 = vector.broadcast %28 : vector<16x1xi32> to vector<16x4xi32>
    %30 = arith.cmpi eq, %8, %29 : vector<16x4xi32>
    %31 = arith.subf %22, %10 : vector<16x1xf32>
    %32 = math.exp %31 : vector<16x1xf32>
    %cst_10 = arith.constant 1.000000e+00 : f32
    %33 = vector.broadcast %cst_10 : f32 to vector<16x1xf32>
    %34 = arith.addf %33, %32 : vector<16x1xf32>
    %cst_11 = arith.constant 1.000000e+00 : f32
    %35 = vector.broadcast %cst_11 : f32 to vector<16x1xf32>
    %36 = arith.divf %35, %34 : vector<16x1xf32>
    %cst_12 = arith.constant 0.000000e+00 : f32
    %37 = vector.shape_cast %36 : vector<16x1xf32> to vector<16x1xf32>
    %38 = vector.broadcast %37 : vector<16x1xf32> to vector<16x4xf32>
    %39 = vector.broadcast %cst_12 : f32 to vector<16x4xf32>
    %40 = arith.select %18, %38, %39 : vector<16x4xi1>, vector<16x4xf32>
    %41 = arith.mulf %32, %36 : vector<16x1xf32>
    %cst_13 = arith.constant 0.000000e+00 : f32
    %42 = vector.shape_cast %41 : vector<16x1xf32> to vector<16x1xf32>
    %43 = vector.broadcast %42 : vector<16x1xf32> to vector<16x4xf32>
    %44 = vector.broadcast %cst_13 : f32 to vector<16x4xf32>
    %45 = arith.select %30, %43, %44 : vector<16x4xi1>, vector<16x4xf32>
    %46 = arith.addf %40, %45 : vector<16x4xf32>
    %cst_14 = arith.constant 0.707106769 : f32
    %47 = vector.broadcast %cst_14 : f32 to vector<16x256xf32>
    %48 = arith.mulf %6, %47 : vector<16x256xf32>
    %49 = math.absf %48 : vector<16x256xf32>
    %cst_15 = arith.constant 0.327591091 : f32
    %50 = vector.broadcast %cst_15 : f32 to vector<16x256xf32>
    %51 = arith.mulf %50, %49 : vector<16x256xf32>
    %cst_16 = arith.constant 1.000000e+00 : f32
    %52 = vector.broadcast %cst_16 : f32 to vector<16x256xf32>
    %53 = arith.addf %52, %51 : vector<16x256xf32>
    %cst_17 = arith.constant 1.000000e+00 : f32
    %54 = vector.broadcast %cst_17 : f32 to vector<16x256xf32>
    %55 = arith.divf %54, %53 : vector<16x256xf32>
    %cst_18 = arith.constant 1.06140542 : f32
    %56 = vector.broadcast %cst_18 : f32 to vector<16x256xf32>
    %57 = arith.mulf %56, %55 : vector<16x256xf32>
    %cst_19 = arith.constant 1.45315206 : f32
    %58 = vector.broadcast %cst_19 : f32 to vector<16x256xf32>
    %59 = arith.subf %57, %58 : vector<16x256xf32>
    %60 = arith.mulf %59, %55 : vector<16x256xf32>
    %cst_20 = arith.constant 1.42141378 : f32
    %61 = vector.broadcast %cst_20 : f32 to vector<16x256xf32>
    %62 = arith.addf %60, %61 : vector<16x256xf32>
    %63 = arith.mulf %62, %55 : vector<16x256xf32>
    %cst_21 = arith.constant 0.284496725 : f32
    %64 = vector.broadcast %cst_21 : f32 to vector<16x256xf32>
    %65 = arith.subf %63, %64 : vector<16x256xf32>
    %66 = arith.mulf %65, %55 : vector<16x256xf32>
    %cst_22 = arith.constant 0.254829586 : f32
    %67 = vector.broadcast %cst_22 : f32 to vector<16x256xf32>
    %68 = arith.addf %66, %67 : vector<16x256xf32>
    %69 = arith.mulf %68, %55 : vector<16x256xf32>
    %cst_23 = arith.constant 0.000000e+00 : f32
    %70 = vector.broadcast %cst_23 : f32 to vector<16x256xf32>
    %71 = arith.subf %70, %49 : vector<16x256xf32>
    %72 = arith.mulf %71, %49 : vector<16x256xf32>
    %73 = math.exp %72 : vector<16x256xf32>
    %74 = arith.mulf %69, %73 : vector<16x256xf32>
    %cst_24 = arith.constant 1.000000e+00 : f32
    %75 = vector.broadcast %cst_24 : f32 to vector<16x256xf32>
    %76 = arith.subf %75, %74 : vector<16x256xf32>
    %cst_25 = arith.constant 0.000000e+00 : f32
    %77 = vector.broadcast %cst_25 : f32 to vector<16x256xf32>
    %78 = arith.cmpf oge, %48, %77 : vector<16x256xf32>
    %cst_26 = arith.constant 0.000000e+00 : f32
    %79 = vector.broadcast %cst_26 : f32 to vector<16x256xf32>
    %80 = arith.subf %79, %76 : vector<16x256xf32>
    %81 = arith.select %78, %76, %80 : vector<16x256xi1>, vector<16x256xf32>
    %cst_27 = arith.constant 5.000000e-01 : f32
    %82 = vector.broadcast %cst_27 : f32 to vector<16x256xf32>
    %83 = arith.mulf %82, %6 : vector<16x256xf32>
    %cst_28 = arith.constant 1.000000e+00 : f32
    %84 = vector.broadcast %cst_28 : f32 to vector<16x256xf32>
    %85 = arith.addf %84, %81 : vector<16x256xf32>
    %86 = arith.mulf %83, %85 : vector<16x256xf32>
    %c0_29 = arith.constant 0 : index
    %c0_30 = arith.constant 0 : index
    %87 = vector.load %arg3[%c0_29, %c0_30] : memref<4x260xf32, #tpu.memory_space<vmem>>, vector<4x260xf32>
    %cst_31 = arith.constant dense<0.000000e+00> : vector<16x260xf32>
    %88 = tpu.matmul %46, %87, %cst_31 {dimension_numbers = #tpu.dot_dimension_numbers<[1], [0], [0], [1], [0, 0, 1, 1], [], []>} : vector<16x4xf32>, vector<4x260xf32>, vector<16x260xf32> -> vector<16x260xf32>
    %89 = vector.extract_strided_slice %88 {offsets = [0, 0], sizes = [16, 256], strides = [1, 1]} : vector<16x260xf32> to vector<16x256xf32>
    %90 = arith.mulf %86, %89 : vector<16x256xf32>
    %91 = vector.shape_cast %90 : vector<16x256xf32> to vector<2x8x256xf32>
    %cst_32 = arith.constant dense<0.000000e+00> : vector<2x8xf32>
    %92 = vector.multi_reduction <add>, %91, %cst_32 [2] : vector<2x8x256xf32> to vector<2x8xf32>
    %93 = vector.extract_strided_slice %88 {offsets = [0, 256], sizes = [16, 4], strides = [1, 1]} : vector<16x260xf32> to vector<16x4xf32>
    %94 = vector.shape_cast %93 : vector<16x4xf32> to vector<2x8x4xf32>
    %cst_33 = arith.constant dense<0.000000e+00> : vector<2x8xf32>
    %95 = vector.multi_reduction <add>, %94, %cst_33 [2] : vector<2x8x4xf32> to vector<2x8xf32>
    %96 = arith.addf %92, %95 : vector<2x8xf32>
    %cst_34 = arith.constant dense<0xFF800000> : vector<2xf32>
    %97 = vector.multi_reduction <maximumf>, %96, %cst_34 [1] : vector<2x8xf32> to vector<2xf32>
    %98 = vector.shape_cast %97 : vector<2xf32> to vector<2x1xf32>
    %99 = vector.broadcast %98 : vector<2x1xf32> to vector<2x8xf32>
    %100 = arith.subf %96, %99 : vector<2x8xf32>
    %101 = math.exp %100 : vector<2x8xf32>
    %cst_35 = arith.constant dense<0.000000e+00> : vector<2xf32>
    %102 = vector.multi_reduction <add>, %101, %cst_35 [1] : vector<2x8xf32> to vector<2xf32>
    %103 = vector.shape_cast %102 : vector<2xf32> to vector<2x1xf32>
    %104 = math.log %103 : vector<2x1xf32>
    %105 = arith.addf %104, %98 : vector<2x1xf32>
    %106 = vector.broadcast %105 : vector<2x1xf32> to vector<2x8xf32>
    %107 = arith.subf %96, %106 : vector<2x8xf32>
    %c0_36 = arith.constant 0 : index
    %c0_37 = arith.constant 0 : index
    %108 = vector.load %arg4[%c0_36, %c0_37] : memref<2x8xf32, #tpu.memory_space<vmem>>, vector<2x8xf32>
    tpu.vector_store %arg4[%c0_36, %c0_37], %107 {strides = array<i32>} : memref<2x8xf32, #tpu.memory_space<vmem>>, vector<2x8xf32>,
    return
  }
  func.func @transform_0(%arg0: i32) -> (i32, i32) {
    %c0_i32 = arith.constant 0 : i32
    %c0_i32_0 = arith.constant 0 : i32
    %c0_i32_1 = arith.constant 0 : i32
    return %c0_i32, %c0_i32_0 : i32, i32
  }
  func.func @transform_1(%arg0: i32) -> (i32, i32) {
    %c0_i32 = arith.constant 0 : i32
    %c0_i32_0 = arith.constant 0 : i32
    %c0_i32_1 = arith.constant 0 : i32
    return %c0_i32, %c0_i32_0 : i32, i32
  }
  func.func @transform_2(%arg0: i32) -> (i32, i32) {
    %c0_i32 = arith.constant 0 : i32
    %c0_i32_0 = arith.constant 0 : i32
    %c0_i32_1 = arith.constant 0 : i32
    return %c0_i32, %c0_i32_0 : i32, i32
  }
  func.func @transform_3(%arg0: i32) -> (i32, i32) {
    %c0_i32 = arith.constant 0 : i32
    %c0_i32_0 = arith.constant 0 : i32
    %c0_i32_1 = arith.constant 0 : i32
    return %c0_i32, %c0_i32_0 : i32, i32
  }
}

</mosaic_0001>

<llo_original>
// kernel: example_model_forward.1
$region0: #{example_model_forward.1}
  #allocation0 [shape = 'u32[]', space=smem, size = 0x4, offset = 0x4, fixed_abs, tag = 'smem constant byte address 0x4 - core index']
  #allocation1 [shape = 'u32[144,128]{1,0:T(1,128)}', space=vmem, size = 0x12000, scoped, tag = 'internal scratch']
  %s0 = inlined_call_operand.hbm [shape: f32[16,32], index: 0, kind: input, shape index: {}]
  %s1 = inlined_call_operand.hbm [shape: f32[33,260], index: 1, kind: input, shape index: {}]
  %s2 = inlined_call_operand.hbm [shape: f32[4,260], index: 2, kind: input, shape index: {}]
  %s3 = inlined_call_operand.hbm [shape: f32[2,8], index: 3, kind: output, shape index: {}]
  %s4 = sld [smem:[#allocation0]]
  $region34: #{example_model_forward.1} parent=0
    _
  %s6 = ssub.s32 1, %s4
  %s7 = scalar_select 0, %s6, %s4
  $region1: #{example_model_forward.1} parent=0
    #allocation2 [shape = 'u8[8192]{0}', space=vmem, size = 0x2000, scoped, tag = 'input window, operand 0, single buffered']
    #allocation3 [shape = 's32[1]{0}', space=sflag, size = 0x4, scoped, tag = 'scoped memory for example_model_forward.1']
    #allocation4 [shape = 's32[1]{0}', space=sflag, size = 0x4, scoped, tag = 'scoped memory for example_model_forward.1']
    #allocation5 [shape = 'u8[61440]{0}', space=vmem, size = 0xf000, scoped, tag = 'input window, operand 1, single buffered']
    #allocation6 [shape = 's32[1]{0}', space=sflag, size = 0x4, scoped, tag = 'scoped memory for example_model_forward.1']
    #allocation7 [shape = 'u8[6144]{0}', space=vmem, size = 0x1800, scoped, tag = 'input window, operand 2, single buffered']
    #allocation8 [shape = 'u8[1024]{0}', space=vmem, size = 0x400, scoped, tag = 'output window, operand 0, single buffered']
    %8 = vsyncpa [#allocation3], 0
    %9 = vsyncpa [#allocation6], 0
    %10 = vsyncpa [#allocation4], 0
    // Predicated region
    $region2: #{example_model_forward.1} parent=1 // pred_check
      _
    $region3: #{example_model_forward.1} parent=1 // pred_check_branch
      %12 = sbr.rel (0) target = $region5
    $region4: #{example_model_forward.1} parent=1 // pred_region
      %s14 = ssub.s32 256, 256
      %15 = vsyncadd [#allocation3], %s14
      %s16 = sshll.u32 [#allocation2], 4
      %s17 = int_to_ptr.vmem [resolvable:$true] %s16
      %22 = dma.hbm_to_vmem [thread:$0]  %s0, 256, %s17, [#allocation3], 128, 128, 8
    $region5: #{example_model_forward.1} parent=1 // pred_fallthru
      _
    // Predicated region
    $region6: #{example_model_forward.1} parent=1 // pred_check
      _
    $region7: #{example_model_forward.1} parent=1 // pred_check_branch
      %24 = sbr.rel (0) target = $region9
    $region8: #{example_model_forward.1} parent=1 // pred_region
      %s26 = ssub.s32 1920, 1920
      %27 = vsyncadd [#allocation6], %s26
      %s28 = sshll.u32 [#allocation5], 4
      %s29 = int_to_ptr.vmem [resolvable:$true] %s28
      %34 = dma.hbm_to_vmem [thread:$0]  %s1, 1920, %s29, [#allocation6], 384, 384, 24
    $region9: #{example_model_forward.1} parent=1 // pred_fallthru
      _
    // Predicated region
    $region10: #{example_model_forward.1} parent=1 // pred_check
      _
    $region11: #{example_model_forward.1} parent=1 // pred_check_branch
      %36 = sbr.rel (0) target = $region13
    $region12: #{example_model_forward.1} parent=1 // pred_region
      %s38 = ssub.s32 192, 192
      %39 = vsyncadd [#allocation6], %s38
      %s41 = sshll.u32 [#allocation7], 4
      %s42 = int_to_ptr.vmem [resolvable:$true] %s41
      %44 = dma.hbm_to_vmem [thread:$0]  %s2, 192, %s42, [#allocation6]
    $region13: #{example_model_forward.1} parent=1 // pred_fallthru
      _
    // Predicated region
    $region14: #{example_model_forward.1} parent=1 // pred_check
      _
    $region15: #{example_model_forward.1} parent=1 // pred_check_branch
      %46 = sbr.rel (0) target = $region17
    $region16: #{example_model_forward.1} parent=1 // pred_region
      %47 = dma.done [#allocation3], 256
    $region17: #{example_model_forward.1} parent=1 // pred_fallthru
      _
    // Predicated region
    $region18: #{example_model_forward.1} parent=1 // pred_check
      _
    $region19: #{example_model_forward.1} parent=1 // pred_check_branch
      %49 = sbr.rel (0) target = $region21
    $region20: #{example_model_forward.1} parent=1 // pred_region
      %50 = dma.done [#allocation6], 1920
    $region21: #{example_model_forward.1} parent=1 // pred_fallthru
      _
    // Predicated region
    $region22: #{example_model_forward.1} parent=1 // pred_check
      _
    $region23: #{example_model_forward.1} parent=1 // pred_check_branch
      %52 = sbr.rel (0) target = $region25
    $region24: #{example_model_forward.1} parent=1 // pred_region
      %53 = dma.done [#allocation6], 192
    $region25: #{example_model_forward.1} parent=1 // pred_fallthru
      _
    %v54 = vld [vmem:[#allocation2] sm:$0xff]
    %v55 = vld [vmem:[#allocation2 + $0x8] sm:$0xff]
    %v56 = vld [vmem:[#allocation5] sm:$0xff]
    %v57 = vld [vmem:[#allocation5 + $0x8] sm:$0xff]
    %v58 = vld [vmem:[#allocation5 + $0x10] sm:$0xff]
    %v59 = vld [vmem:[#allocation5 + $0x18] sm:$0xff]
    %v60 = vld [vmem:[#allocation5 + $0x20] sm:$0xff]
    %v61 = vld [vmem:[#allocation5 + $0x28] sm:$0xff]
    %v62 = vld [vmem:[#allocation5 + $0x30] sm:$0xff]
    %v63 = vld [vmem:[#allocation5 + $0x38] sm:$0xff]
    %v64 = vld [vmem:[#allocation5 + $0x40] sm:$0xff]
    %v65 = vld [vmem:[#allocation5 + $0x48] sm:$0xff]
    %v66 = vld [vmem:[#allocation5 + $0x50] sm:$0xff]
    %v67 = vld [vmem:[#allocation5 + $0x58] sm:$0xff]
    %s68 = scalar_lea.vmem [#allocation5], 96
    %v69 = vld [vmem:[%s68] ss:$8 sm:$0x7]
    %v71 = vlaneseq
    %v72 = vshrl.u32 %v71, 7
    %v73 = vsub.s32 0, %v72
    %v74 = vrot.slane %v69, %v73
    %v75 = vlaneseq
    %v76 = vshrl.u32 %v75, 7
    %v77 = vsub.s32 1, %v76
    %v78 = vrot.slane %v69, %v77
    %v79 = vlaneseq
    %v80 = vshrl.u32 %v79, 7
    %v81 = vsub.s32 2, %v80
    %v82 = vrot.slane %v69, %v81
    %vm86 = vcmask 261120
    %v88 = vsel %vm86, %v54, 0
    %v91 = vsel %vm86, %v55, 0
    %93 = vmatprep.subr.mxu0 0.0
    %94 = vmatpush1.msra.mxu0 0.0
    %95 = vmatprep.subr.mxu0 0.0
    %96 = vmatpush1.msra.mxu0 0.0
    %97 = vmatprep.subr.mxu0 0.0
    %98 = vmatpush1.msra.mxu0 0.0
    %99 = vmatprep.subr.mxu0 0.0
    %100 = vmatpush1.msra.mxu0 0.0
    %101 = vmatprep.subr.mxu0 0.0
    %102 = vmatpush1.msra.mxu0 0.0
    %103 = vmatprep.subr.mxu0 0.0
    %104 = vmatpush1.msra.mxu0 0.0
    %105 = vmatprep.subr.mxu0 0.0
    %106 = vmatpush1.msra.mxu0 0.0
    %107 = vmatprep.subr.mxu0 0.0
    %108 = vmatpush1.msra.mxu0 0.0
    %109 = vmatprep.subr.mxu0 0.0
    %110 = vmatpush1.msra.mxu0 0.0
    %111 = vmatprep.subr.mxu0 0.0
    %112 = vmatpush1.msra.mxu0 0.0
    %113 = vmatprep.subr.mxu0 0.0
    %114 = vmatpush1.msra.mxu0 0.0
    %115 = vmatprep.subr.mxu0 0.0
    %116 = vmatpush1.msra.mxu0 0.0
    %117 = vmatprep.subr.mxu0 %v66
    %118 = vmatpush1.msra.mxu0 %v65
    %119 = vmatprep.subr.mxu0 %v63
    %120 = vmatpush1.msra.mxu0 %v62
    %121 = vmatprep.subr.mxu0 %v60
    %122 = vmatpush1.msra.mxu0 %v59
    %123 = vmatprep.subr.mxu0 %v57
    %124 = vmatpush1.msra.mxu0 %v56
    %125 = vmatprep.subr.mxu0 0.0
    %126 = vmatpush2.msra.mxu0 0.0
    %127 = vmatprep.subr.mxu0 0.0
    %128 = vmatpush2.msra.mxu0 0.0
    %129 = vmatprep.subr.mxu0 0.0
    %130 = vmatpush2.msra.mxu0 0.0
    %131 = vmatprep.subr.mxu0 0.0
    %132 = vmatpush2.msra.mxu0 0.0
    %133 = vmatprep.subr.mxu0 0.0
    %134 = vmatpush2.msra.mxu0 0.0
    %135 = vmatprep.subr.mxu0 0.0
    %136 = vmatpush2.msra.mxu0 0.0
    %137 = vmatprep.subr.mxu0 0.0
    %138 = vmatpush2.msra.mxu0 0.0
    %139 = vmatprep.subr.mxu0 0.0
    %140 = vmatpush2.msra.mxu0 0.0
    %141 = vmatprep.subr.mxu0 0.0
    %142 = vmatpush2.msra.mxu0 0.0
    %143 = vmatprep.subr.mxu0 0.0
    %144 = vmatpush2.msra.mxu0 0.0
    %145 = vmatprep.subr.mxu0 0.0
    %146 = vmatpush2.msra.mxu0 0.0
    %147 = vmatprep.subr.mxu0 0.0
    %148 = vmatpush2.msra.mxu0 0.0
    %149 = vmatprep.subr.mxu0 0.0
    %150 = vmatpush2.msra.mxu0 0.0
    %151 = vmatprep.subr.mxu0 0.0
    %152 = vmatpush2.msra.mxu0 0.0
    %153 = vmatprep.subr.mxu0 0.0
    %154 = vmatpush2.msra.mxu0 0.0
    %155 = vmatprep.subr.mxu0 0.0
    %156 = vmatpush2.msra.mxu0 0.0
    %157 = vmatprep.mubr.f32.mxu0 0.0
    %158 = vmatmul.mubr.f32.gmra.mxu0 %v88
    %v159 = vpop.f32.mrf.mxu0
    %v160 = vadd.f32 %v74, %v159
    %v161 = vpop.f32.mrf.mxu0
    %v162 = vadd.f32 %v78, %v161
    %163 = vmatprep.mubr.f32.mxu0 0.0
    %164 = vmatmul.mubr.f32.gmra.mxu0 %v91
    %v165 = vpop.f32.mrf.mxu0
    %v166 = vadd.f32 %v74, %v165
    %v167 = vpop.f32.mrf.mxu0
    %v168 = vadd.f32 %v78, %v167
    %169 = vdwg.mxu0
    %170 = vmatprep.subr.mxu0 0.0
    %171 = vmatpush1.msra.mxu0 0.0
    %172 = vmatprep.subr.mxu0 0.0
    %173 = vmatpush1.msra.mxu0 0.0
    %174 = vmatprep.subr.mxu0 0.0
    %175 = vmatpush1.msra.mxu0 0.0
    %176 = vmatprep.subr.mxu0 0.0
    %177 = vmatpush1.msra.mxu0 0.0
    %178 = vmatprep.subr.mxu0 0.0
    %179 = vmatpush1.msra.mxu0 0.0
    %180 = vmatprep.subr.mxu0 0.0
    %181 = vmatpush1.msra.mxu0 0.0
    %182 = vmatprep.subr.mxu0 0.0
    %183 = vmatpush1.msra.mxu0 0.0
    %184 = vmatprep.subr.mxu0 0.0
    %185 = vmatpush1.msra.mxu0 0.0
    %186 = vmatprep.subr.mxu0 0.0
    %187 = vmatpush1.msra.mxu0 0.0
    %188 = vmatprep.subr.mxu0 0.0
    %189 = vmatpush1.msra.mxu0 0.0
    %190 = vmatprep.subr.mxu0 0.0
    %191 = vmatpush1.msra.mxu0 0.0
    %192 = vmatprep.subr.mxu0 0.0
    %193 = vmatpush1.msra.mxu0 0.0
    %194 = vmatprep.subr.mxu0 0.0
    %195 = vmatpush1.msra.mxu0 %v67
    %196 = vmatprep.subr.mxu0 0.0
    %197 = vmatpush1.msra.mxu0 %v64
    %198 = vmatprep.subr.mxu0 0.0
    %199 = vmatpush1.msra.mxu0 %v61
    %200 = vmatprep.subr.mxu0 0.0
    %201 = vmatpush1.msra.mxu0 %v58
    %202 = vmatprep.subr.mxu0 0.0
    %203 = vmatpush2.msra.mxu0 0.0
    %204 = vmatprep.subr.mxu0 0.0
    %205 = vmatpush2.msra.mxu0 0.0
    %206 = vmatprep.subr.mxu0 0.0
    %207 = vmatpush2.msra.mxu0 0.0
    %208 = vmatprep.subr.mxu0 0.0
    %209 = vmatpush2.msra.mxu0 0.0
    %210 = vmatprep.subr.mxu0 0.0
    %211 = vmatpush2.msra.mxu0 0.0
    %212 = vmatprep.subr.mxu0 0.0
    %213 = vmatpush2.msra.mxu0 0.0
    %214 = vmatprep.subr.mxu0 0.0
    %215 = vmatpush2.msra.mxu0 0.0
    %216 = vmatprep.subr.mxu0 0.0
    %217 = vmatpush2.msra.mxu0 0.0
    %218 = vmatprep.subr.mxu0 0.0
    %219 = vmatpush2.msra.mxu0 0.0
    %220 = vmatprep.subr.mxu0 0.0
    %221 = vmatpush2.msra.mxu0 0.0
    %222 = vmatprep.subr.mxu0 0.0
    %223 = vmatpush2.msra.mxu0 0.0
    %224 = vmatprep.subr.mxu0 0.0
    %225 = vmatpush2.msra.mxu0 0.0
    %226 = vmatprep.subr.mxu0 0.0
    %227 = vmatpush2.msra.mxu0 0.0
    %228 = vmatprep.subr.mxu0 0.0
    %229 = vmatpush2.msra.mxu0 0.0
    %230 = vmatprep.subr.mxu0 0.0
    %231 = vmatpush2.msra.mxu0 0.0
    %232 = vmatprep.subr.mxu0 0.0
    %233 = vmatpush2.msra.mxu0 0.0
    %234 = vmatprep.mubr.f32.mxu0 0.0
    %235 = vmatmul.mubr.f32.gmra.mxu0 %v88
    %v236 = vpop.f32.mrf.mxu0
    %v237 = vadd.f32 %v82, %v236
    %v238 = vpop.f32.mrf.mxu0
    %239 = vmatprep.mubr.f32.mxu0 0.0
    %240 = vmatmul.mubr.f32.gmra.mxu0 %v91
    %v241 = vpop.f32.mrf.mxu0
    %v242 = vadd.f32 %v82, %v241
    %v243 = vpop.f32.mrf.mxu0
    %244 = vdwg.mxu0
    %v245 = vlaneseq
    %v246 = vand.u32 %v245, 127
    %vm247 = vcmask 31744
    %v248 = vsel %vm247, %v237, -inf
    %249 = vmax.xlane.f32.xlu0 %v248
    %v250 = vpop.xlane.xlu0 %249
    %v251 = vsel %vm247, %v242, -inf
    %252 = vmax.xlane.f32.xlu0 %v251
    %v253 = vpop.xlane.xlu0 %252
    %vm254 = vcmp.eq.f32.partialorder %v237, %v250
    %vm255 = vcmp.eq.f32.partialorder %v242, %v253
    %v256 = vsel %vm254, %v246, 4
    %v257 = vsel %vm255, %v246, 4
    %v258 = vsel %vm247, %v256, 2147483647
    %v259 = vand.u32 %v258, 65535
    %v260 = vshra.s32 %v258, 16
    %v261 = vcvt.s32.f32 %v259
    %v262 = vcvt.s32.f32 %v260
    %263 = vmin.xlane.f32.xlu0 %v262
    %v264 = vpop.xlane.xlu0 %263
    %vm265 = vcmp.eq.f32.partialorder %v262, %v264
    %v266 = vsel %vm265, %v261, inf
    %267 = vmin.xlane.f32.xlu0 %v266
    %v268 = vpop.xlane.xlu0 %267
    %v269 = vcvt.f32.s32 %v268
    %v270 = vcvt.f32.s32 %v264
    %v271 = vshll.u32 %v270, 16
    %v272 = vadd.s32 %v271, %v269
    %v273 = vsel %vm247, %v257, 2147483647
    %v274 = vand.u32 %v273, 65535
    %v275 = vshra.s32 %v273, 16
    %v276 = vcvt.s32.f32 %v274
    %v277 = vcvt.s32.f32 %v275
    %278 = vmin.xlane.f32.xlu0 %v277
    %v279 = vpop.xlane.xlu0 %278
    %vm280 = vcmp.eq.f32.partialorder %v277, %v279
    %v281 = vsel %vm280, %v276, inf
    %282 = vmin.xlane.f32.xlu0 %v281
    %v283 = vpop.xlane.xlu0 %282
    %v284 = vcvt.f32.s32 %v283
    %v285 = vcvt.f32.s32 %v279
    %v286 = vshll.u32 %v285, 16
    %v287 = vadd.s32 %v286, %v284
    %vm288 = vcmp.eq.s32.totalorder %v246, %v272
    %vm289 = vcmp.eq.s32.totalorder %v246, %v287
    %v290 = vsel %vm288, -inf, %v237
    %v291 = vsel %vm289, -inf, %v242
    %v292 = vsel %vm247, %v290, -inf
    %293 = vmax.xlane.f32.xlu0 %v292
    %v294 = vpop.xlane.xlu0 %293
    %v295 = vsel %vm247, %v291, -inf
    %296 = vmax.xlane.f32.xlu0 %v295
    %v297 = vpop.xlane.xlu0 %296
    %vm298 = vcmp.eq.f32.partialorder %v290, %v294
    %vm299 = vcmp.eq.f32.partialorder %v291, %v297
    %v300 = vsel %vm298, %v246, 4
    %v301 = vsel %vm299, %v246, 4
    %v302 = vsel %vm247, %v300, 2147483647
    %v303 = vand.u32 %v302, 65535
    %v304 = vshra.s32 %v302, 16
    %v305 = vcvt.s32.f32 %v303
    %v306 = vcvt.s32.f32 %v304
    %307 = vmin.xlane.f32.xlu0 %v306
    %v308 = vpop.xlane.xlu0 %307
    %vm309 = vcmp.eq.f32.partialorder %v306, %v308
    %v310 = vsel %vm309, %v305, inf
    %311 = vmin.xlane.f32.xlu0 %v310
    %v312 = vpop.xlane.xlu0 %311
    %v313 = vcvt.f32.s32 %v312
    %v314 = vcvt.f32.s32 %v308
    %v315 = vshll.u32 %v314, 16
    %v316 = vadd.s32 %v315, %v313
    %v317 = vsel %vm247, %v301, 2147483647
    %v318 = vand.u32 %v317, 65535
    %v319 = vshra.s32 %v317, 16
    %v320 = vcvt.s32.f32 %v318
    %v321 = vcvt.s32.f32 %v319
    %322 = vmin.xlane.f32.xlu0 %v321
    %v323 = vpop.xlane.xlu0 %322
    %vm324 = vcmp.eq.f32.partialorder %v321, %v323
    %v325 = vsel %vm324, %v320, inf
    %326 = vmin.xlane.f32.xlu0 %v325
    %v327 = vpop.xlane.xlu0 %326
    %v328 = vcvt.f32.s32 %v327
    %v329 = vcvt.f32.s32 %v323
    %v330 = vshll.u32 %v329, 16
    %v331 = vadd.s32 %v330, %v328
    %vm332 = vcmp.eq.s32.totalorder %v246, %v316
    %vm333 = vcmp.eq.s32.totalorder %v246, %v331
    %v334 = vsub.f32 %v294, %v250
    %v335 = vsub.f32 %v297, %v253
    %v336 = vmul.f32 %v334, 1.442695
    %v337 = vpow.pop %v336
    %v338 = vmul.f32 %v335, 1.442695
    %v339 = vpow.pop %v338
    %v340 = vadd.f32 %v337, 1.0
    %v341 = vadd.f32 %v339, 1.0
    %v342 = vrcp.pop %v340
    %v343 = vmul.f32 1.0, %v342
    %v344 = vrcp.pop %v341
    %v345 = vmul.f32 1.0, %v344
    %v346 = vsel %vm288, %v343, 0.0
    %v347 = vsel %vm289, %v345, 0.0
    %v348 = vmul.f32 %v337, %v343
    %v349 = vmul.f32 %v339, %v345
    %v350 = vsel %vm332, %v348, 0.0
    %v351 = vsel %vm333, %v349, 0.0
    %v352 = vadd.f32 %v346, %v350
    %v353 = vadd.f32 %v347, %v351
    %v354 = vmul.f32 %v160, 0.70710677
    %v355 = vmul.f32 %v162, 0.70710677
    %v356 = vmul.f32 %v166, 0.70710677
    %v357 = vmul.f32 %v168, 0.70710677
    %v358 = vand.u32 2147483647, %v354
    %v359 = vand.u32 2147483647, %v355
    %v360 = vand.u32 2147483647, %v356
    %v361 = vand.u32 2147483647, %v357
    %v362 = vmul.f32 %v358, 0.3275911
    %v363 = vmul.f32 %v359, 0.3275911
    %v364 = vmul.f32 %v360, 0.3275911
    %v365 = vmul.f32 %v361, 0.3275911
    %v366 = vadd.f32 %v362, 1.0
    %v367 = vadd.f32 %v363, 1.0
    %v368 = vadd.f32 %v364, 1.0
    %v369 = vadd.f32 %v365, 1.0
    %v370 = vrcp.pop %v366
    %v371 = vmul.f32 1.0, %v370
    %v372 = vrcp.pop %v367
    %v373 = vmul.f32 1.0, %v372
    %v374 = vrcp.pop %v368
    %v375 = vmul.f32 1.0, %v374
    %v376 = vrcp.pop %v369
    %v377 = vmul.f32 1.0, %v376
    %v378 = vmul.f32 %v371, 1.0614054
    %v379 = vmul.f32 %v373, 1.0614054
    %v380 = vmul.f32 %v375, 1.0614054
    %v381 = vmul.f32 %v377, 1.0614054
    %v382 = vsub.f32 %v378, 1.4531521
    %v383 = vsub.f32 %v379, 1.4531521
    %v384 = vsub.f32 %v380, 1.4531521
    %v385 = vsub.f32 %v381, 1.4531521
    %v386 = vmul.f32 %v382, %v371
    %v387 = vmul.f32 %v383, %v373
    %v388 = vmul.f32 %v384, %v375
    %v389 = vmul.f32 %v385, %v377
    %v390 = vadd.f32 %v386, 1.4214138
    %v391 = vadd.f32 %v387, 1.4214138
    %v392 = vadd.f32 %v388, 1.4214138
    %v393 = vadd.f32 %v389, 1.4214138
    %v394 = vmul.f32 %v390, %v371
    %v395 = vmul.f32 %v391, %v373
    %v396 = vmul.f32 %v392, %v375
    %v397 = vmul.f32 %v393, %v377
    %v398 = vsub.f32 %v394, 0.28449672
    %v399 = vsub.f32 %v395, 0.28449672
    %v400 = vsub.f32 %v396, 0.28449672
    %v401 = vsub.f32 %v397, 0.28449672
    %v402 = vmul.f32 %v398, %v371
    %v403 = vmul.f32 %v399, %v373
    %v404 = vmul.f32 %v400, %v375
    %v405 = vmul.f32 %v401, %v377
    %v406 = vadd.f32 %v402, 0.2548296
    %v407 = vadd.f32 %v403, 0.2548296
    %v408 = vadd.f32 %v404, 0.2548296
    %v409 = vadd.f32 %v405, 0.2548296
    %v410 = vmul.f32 %v406, %v371
    %v411 = vmul.f32 %v407, %v373
    %v412 = vmul.f32 %v408, %v375
    %v413 = vmul.f32 %v409, %v377
    %v414 = vsub.f32 0.0, %v358
    %v415 = vsub.f32 0.0, %v359
    %v416 = vsub.f32 0.0, %v360
    %v417 = vsub.f32 0.0, %v361
    %v418 = vmul.f32 %v414, %v358
    %v419 = vmul.f32 %v415, %v359
    %v420 = vmul.f32 %v416, %v360
    %v421 = vmul.f32 %v417, %v361
    %v422 = vmul.f32 %v418, 1.442695
    %v423 = vpow.pop %v422
    %v424 = vmul.f32 %v419, 1.442695
    %v425 = vpow.pop %v424
    %v426 = vmul.f32 %v420, 1.442695
    %v427 = vpow.pop %v426
    %v428 = vmul.f32 %v421, 1.442695
    %v429 = vpow.pop %v428
    %v430 = vmul.f32 %v410, %v423
    %v431 = vmul.f32 %v411, %v425
    %v432 = vmul.f32 %v412, %v427
    %v433 = vmul.f32 %v413, %v429
    %v434 = vsub.f32 1.0, %v430
    %v435 = vsub.f32 1.0, %v431
    %v436 = vsub.f32 1.0, %v432
    %v437 = vsub.f32 1.0, %v433
    %vm438 = vcmp.ge.f32.partialorder %v354, 0.0
    %vm439 = vcmp.ge.f32.partialorder %v355, 0.0
    %vm440 = vcmp.ge.f32.partialorder %v356, 0.0
    %vm441 = vcmp.ge.f32.partialorder %v357, 0.0
    %v442 = vsub.f32 0.0, %v434
    %v443 = vsub.f32 0.0, %v435
    %v444 = vsub.f32 0.0, %v436
    %v445 = vsub.f32 0.0, %v437
    %v446 = vsel %vm438, %v434, %v442
    %v447 = vsel %vm439, %v435, %v443
    %v448 = vsel %vm440, %v436, %v444
    %v449 = vsel %vm441, %v437, %v445
    %v450 = vmul.f32 %v160, 0.5
    %v451 = vmul.f32 %v162, 0.5
    %v452 = vmul.f32 %v166, 0.5
    %v453 = vmul.f32 %v168, 0.5
    %v454 = vadd.f32 %v446, 1.0
    %v455 = vadd.f32 %v447, 1.0
    %v456 = vadd.f32 %v448, 1.0
    %v457 = vadd.f32 %v449, 1.0
    %v458 = vmul.f32 %v450, %v454
    %v459 = vmul.f32 %v451, %v455
    %v460 = vmul.f32 %v452, %v456
    %v461 = vmul.f32 %v453, %v457
    %v462 = vld [vmem:[#allocation7] sm:$0xff]
    %v463 = vld [vmem:[#allocation7 + $0x8] sm:$0xf]
    %v466 = vcombine.high %v462, %v462
    %v468 = vsel %vm247, %v352, 0
    %v471 = vsel %vm247, %v353, 0
    %vm473 = vcmask 1043456
    %v474 = vsel %vm473, %v462, 0
    %v476 = vsel %vm473, %v466, 0
    %v478 = vsel %vm473, %v463, 0
    %480 = vmatprep.subr.mxu0 0.0
    %481 = vmatpush1.msra.mxu0 0.0
    %482 = vmatprep.subr.mxu0 0.0
    %483 = vmatpush1.msra.mxu0 0.0
    %484 = vmatprep.subr.mxu0 0.0
    %485 = vmatpush1.msra.mxu0 0.0
    %486 = vmatprep.subr.mxu0 0.0
    %487 = vmatpush1.msra.mxu0 0.0
    %488 = vmatprep.subr.mxu0 0.0
    %489 = vmatpush1.msra.mxu0 0.0
    %490 = vmatprep.subr.mxu0 0.0
    %491 = vmatpush1.msra.mxu0 0.0
    %492 = vmatprep.subr.mxu0 0.0
    %493 = vmatpush1.msra.mxu0 0.0
    %494 = vmatprep.subr.mxu0 0.0
    %495 = vmatpush1.msra.mxu0 0.0
    %496 = vmatprep.subr.mxu0 0.0
    %497 = vmatpush1.msra.mxu0 0.0
    %498 = vmatprep.subr.mxu0 0.0
    %499 = vmatpush1.msra.mxu0 0.0
    %500 = vmatprep.subr.mxu0 0.0
    %501 = vmatpush1.msra.mxu0 0.0
    %502 = vmatprep.subr.mxu0 0.0
    %503 = vmatpush1.msra.mxu0 0.0
    %504 = vmatprep.subr.mxu0 0.0
    %505 = vmatpush1.msra.mxu0 0.0
    %506 = vmatprep.subr.mxu0 0.0
    %507 = vmatpush1.msra.mxu0 0.0
    %508 = vmatprep.subr.mxu0 0.0
    %509 = vmatpush1.msra.mxu0 0.0
    %510 = vmatprep.subr.mxu0 %v476
    %511 = vmatpush1.msra.mxu0 %v474
    %512 = vmatprep.subr.mxu0 0.0
    %513 = vmatpush2.msra.mxu0 0.0
    %514 = vmatprep.subr.mxu0 0.0
    %515 = vmatpush2.msra.mxu0 0.0
    %516 = vmatprep.subr.mxu0 0.0
    %517 = vmatpush2.msra.mxu0 0.0
    %518 = vmatprep.subr.mxu0 0.0
    %519 = vmatpush2.msra.mxu0 0.0
    %520 = vmatprep.subr.mxu0 0.0
    %521 = vmatpush2.msra.mxu0 0.0
    %522 = vmatprep.subr.mxu0 0.0
    %523 = vmatpush2.msra.mxu0 0.0
    %524 = vmatprep.subr.mxu0 0.0
    %525 = vmatpush2.msra.mxu0 0.0
    %526 = vmatprep.subr.mxu0 0.0
    %527 = vmatpush2.msra.mxu0 0.0
    %528 = vmatprep.subr.mxu0 0.0
    %529 = vmatpush2.msra.mxu0 0.0
    %530 = vmatprep.subr.mxu0 0.0
    %531 = vmatpush2.msra.mxu0 0.0
    %532 = vmatprep.subr.mxu0 0.0
    %533 = vmatpush2.msra.mxu0 0.0
    %534 = vmatprep.subr.mxu0 0.0
    %535 = vmatpush2.msra.mxu0 0.0
    %536 = vmatprep.subr.mxu0 0.0
    %537 = vmatpush2.msra.mxu0 0.0
    %538 = vmatprep.subr.mxu0 0.0
    %539 = vmatpush2.msra.mxu0 0.0
    %540 = vmatprep.subr.mxu0 0.0
    %541 = vmatpush2.msra.mxu0 0.0
    %542 = vmatprep.subr.mxu0 0.0
    %543 = vmatpush2.msra.mxu0 0.0
    %544 = vmatprep.mubr.f32.mxu0 0.0
    %545 = vmatmul.mubr.f32.gmra.mxu0 %v468
    %v546 = vpop.f32.mrf.mxu0
    %v547 = vadd.f32 0.0, %v546
    %v548 = vpop.f32.mrf.mxu0
    %v549 = vadd.f32 0.0, %v548
    %550 = vmatprep.mubr.f32.mxu0 0.0
    %551 = vmatmul.mubr.f32.gmra.mxu0 %v471
    %v552 = vpop.f32.mrf.mxu0
    %v553 = vadd.f32 0.0, %v552
    %v554 = vpop.f32.mrf.mxu0
    %v555 = vadd.f32 0.0, %v554
    %556 = vdwg.mxu0
    %557 = vmatprep.subr.mxu0 0.0
    %558 = vmatpush1.msra.mxu0 0.0
    %559 = vmatprep.subr.mxu0 0.0
    %560 = vmatpush1.msra.mxu0 0.0
    %561 = vmatprep.subr.mxu0 0.0
    %562 = vmatpush1.msra.mxu0 0.0
    %563 = vmatprep.subr.mxu0 0.0
    %564 = vmatpush1.msra.mxu0 0.0
    %565 = vmatprep.subr.mxu0 0.0
    %566 = vmatpush1.msra.mxu0 0.0
    %567 = vmatprep.subr.mxu0 0.0
    %568 = vmatpush1.msra.mxu0 0.0
    %569 = vmatprep.subr.mxu0 0.0
    %570 = vmatpush1.msra.mxu0 0.0
    %571 = vmatprep.subr.mxu0 0.0
    %572 = vmatpush1.msra.mxu0 0.0
    %573 = vmatprep.subr.mxu0 0.0
    %574 = vmatpush1.msra.mxu0 0.0
    %575 = vmatprep.subr.mxu0 0.0
    %576 = vmatpush1.msra.mxu0 0.0
    %577 = vmatprep.subr.mxu0 0.0
    %578 = vmatpush1.msra.mxu0 0.0
    %579 = vmatprep.subr.mxu0 0.0
    %580 = vmatpush1.msra.mxu0 0.0
    %581 = vmatprep.subr.mxu0 0.0
    %582 = vmatpush1.msra.mxu0 0.0
    %583 = vmatprep.subr.mxu0 0.0
    %584 = vmatpush1.msra.mxu0 0.0
    %585 = vmatprep.subr.mxu0 0.0
    %586 = vmatpush1.msra.mxu0 0.0
    %587 = vmatprep.subr.mxu0 0.0
    %588 = vmatpush1.msra.mxu0 %v478
    %589 = vmatprep.subr.mxu0 0.0
    %590 = vmatpush2.msra.mxu0 0.0
    %591 = vmatprep.subr.mxu0 0.0
    %592 = vmatpush2.msra.mxu0 0.0
    %593 = vmatprep.subr.mxu0 0.0
    %594 = vmatpush2.msra.mxu0 0.0
    %595 = vmatprep.subr.mxu0 0.0
    %596 = vmatpush2.msra.mxu0 0.0
    %597 = vmatprep.subr.mxu0 0.0
    %598 = vmatpush2.msra.mxu0 0.0
    %599 = vmatprep.subr.mxu0 0.0
    %600 = vmatpush2.msra.mxu0 0.0
    %601 = vmatprep.subr.mxu0 0.0
    %602 = vmatpush2.msra.mxu0 0.0
    %603 = vmatprep.subr.mxu0 0.0
    %604 = vmatpush2.msra.mxu0 0.0
    %605 = vmatprep.subr.mxu0 0.0
    %606 = vmatpush2.msra.mxu0 0.0
    %607 = vmatprep.subr.mxu0 0.0
    %608 = vmatpush2.msra.mxu0 0.0
    %609 = vmatprep.subr.mxu0 0.0
    %610 = vmatpush2.msra.mxu0 0.0
    %611 = vmatprep.subr.mxu0 0.0
    %612 = vmatpush2.msra.mxu0 0.0
    %613 = vmatprep.subr.mxu0 0.0
    %614 = vmatpush2.msra.mxu0 0.0
    %615 = vmatprep.subr.mxu0 0.0
    %616 = vmatpush2.msra.mxu0 0.0
    %617 = vmatprep.subr.mxu0 0.0
    %618 = vmatpush2.msra.mxu0 0.0
    %619 = vmatprep.subr.mxu0 0.0
    %620 = vmatpush2.msra.mxu0 0.0
    %621 = vmatprep.mubr.f32.mxu0 0.0
    %622 = vmatmul.mubr.f32.gmra.mxu0 %v468
    %v623 = vpop.f32.mrf.mxu0
    %v624 = vadd.f32 0.0, %v623
    %v625 = vpop.f32.mrf.mxu0
    %626 = vmatprep.mubr.f32.mxu0 0.0
    %627 = vmatmul.mubr.f32.gmra.mxu0 %v471
    %v628 = vpop.f32.mrf.mxu0
    %v629 = vadd.f32 0.0, %v628
    %v630 = vpop.f32.mrf.mxu0
    %631 = vdwg.mxu0
    %v632 = vmul.f32 %v458, %v547
    %v633 = vmul.f32 %v459, %v549
    %v634 = vmul.f32 %v460, %v553
    %v635 = vmul.f32 %v461, %v555
    %v636 = vadd.f32 %v632, %v633
    %637 = vadd.xlane.f32.xlu0 %v636
    %v638 = vpop.xlane.xlu0 %637
    %v639 = vadd.f32 %v634, %v635
    %640 = vadd.xlane.f32.xlu0 %v639
    %v641 = vpop.xlane.xlu0 %640
    %v642 = vsel %vm247, %v624, 0.0
    %643 = vadd.xlane.f32.xlu0 %v642
    %v644 = vpop.xlane.xlu0 %643
    %v645 = vsel %vm247, %v629, 0.0
    %646 = vadd.xlane.f32.xlu0 %v645
    %v647 = vpop.xlane.xlu0 %646
    %v648 = vadd.f32 %v638, %v644
    %v649 = vadd.f32 %v641, %v647
    %v652 = vlaneseq
    %v653 = vshrl.u32 %v652, 7
    %v654 = vsub.s32 %v246, %v653
    %v655 = vrot.slane %v648, %v654
    %v656 = vlaneseq
    %v657 = vshrl.u32 %v656, 7
    %v658 = vsub.s32 %v246, %v657
    %v659 = vrot.slane %v649, %v658
    %vm660 = vcmask 1041409
    %v661 = vsel %vm660, %v659, %v655
    %vm663 = vcmask 58368
    %v664 = vsel %vm663, %v661, -inf
    %665 = vmax.xlane.f32.xlu0 %v664
    %v666 = vpop.xlane.xlu0 %665
    %v668 = vlaneseq
    %v669 = vshrl.u32 %v668, 7
    %v670 = vsub.s32 0, %v669
    %v671 = vrot.slane %v666, %v670
    %v672 = vlaneseq
    %v673 = vshrl.u32 %v672, 7
    %v674 = vsub.s32 1, %v673
    %v675 = vrot.slane %v666, %v674
    %v678 = vsub.f32 %v648, %v671
    %v679 = vsub.f32 %v649, %v675
    %v680 = vmul.f32 %v678, 1.442695
    %v681 = vpow.pop %v680
    %v682 = vmul.f32 %v679, 1.442695
    %v683 = vpow.pop %v682
    %686 = vset.pattern.permute.xlu0 0
    %687 = vperm.xlu0 %686, %v681
    %v688 = vpop.permute.xlu0 %687
    %689 = vset.pattern.permute.xlu0 0
    %690 = vperm.xlu0 %689, %v683
    %v691 = vpop.permute.xlu0 %690
    %v692 = vlaneseq
    %v693 = vshrl.u32 %v692, 7
    %v694 = vsub.s32 %v246, %v693
    %v695 = vrot.slane %v688, %v694
    %v696 = vlaneseq
    %v697 = vshrl.u32 %v696, 7
    %v698 = vsub.s32 %v246, %v697
    %v699 = vrot.slane %v691, %v698
    %v700 = vsel %vm660, %v699, %v695
    %v702 = vsel %vm663, %v700, 0.0
    %703 = vadd.xlane.f32.xlu0 %v702
    %v704 = vpop.xlane.xlu0 %703
    %v705 = vlog2.pop %v704
    %v706 = vmul.f32 %v705, 0.6931472
    %v707 = vadd.f32 %v706, %v666
    %v709 = vlaneseq
    %v710 = vshrl.u32 %v709, 7
    %v711 = vsub.s32 0, %v710
    %v712 = vrot.slane %v707, %v711
    %v713 = vlaneseq
    %v714 = vshrl.u32 %v713, 7
    %v715 = vsub.s32 1, %v714
    %v716 = vrot.slane %v707, %v715
    %v719 = vsub.f32 %v648, %v712
    %v720 = vsub.f32 %v649, %v716
    %723 = vset.pattern.permute.xlu0 0
    %724 = vperm.xlu0 %723, %v719
    %v725 = vpop.permute.xlu0 %724
    %726 = vset.pattern.permute.xlu0 0
    %727 = vperm.xlu0 %726, %v720
    %v728 = vpop.permute.xlu0 %727
    %v729 = vlaneseq
    %v730 = vshrl.u32 %v729, 7
    %v731 = vsub.s32 %v246, %v730
    %v732 = vrot.slane %v725, %v731
    %v733 = vlaneseq
    %v734 = vshrl.u32 %v733, 7
    %v735 = vsub.s32 %v246, %v734
    %v736 = vrot.slane %v728, %v735
    %v737 = vsel %vm660, %v736, %v732
    %739 = vst.msk [vmem:[#allocation8] sm:$0x3] %vm663, %v737
    // Predicated region
    $region26: #{example_model_forward.1} parent=1 // pred_check
      _
    $region27: #{example_model_forward.1} parent=1 // pred_check_branch
      %741 = sbr.rel (0) target = $region29
    $region28: #{example_model_forward.1} parent=1 // pred_region
      %s743 = ssub.s32 32, 32
      %744 = vsyncadd [#allocation4], %s743
      %s746 = sshll.u32 [#allocation8], 4
      %s747 = int_to_ptr.vmem [resolvable:$true] %s746
      %749 = dma.vmem_to_hbm [thread:$0]  %s747, 32, %s3, [#allocation4]
    $region29: #{example_model_forward.1} parent=1 // pred_fallthru
      _
    // Predicated region
    $region30: #{example_model_forward.1} parent=1 // pred_check
      _
    $region31: #{example_model_forward.1} parent=1 // pred_check_branch
      %751 = sbr.rel (0) target = $region33
    $region32: #{example_model_forward.1} parent=1 // pred_region
      %752 = dma.done [#allocation4], 32
    $region33: #{example_model_forward.1} parent=1 // pred_fallthru
      _
    %753 = vsyncpa [#allocation3], 1
    %754 = vsyncpa [#allocation6], 1
    %755 = vsyncpa [#allocation4], 1

</llo_original>
